<compile_context>
chip_gen: v5e
topology: v5e:2x2
jax: 0.10.0
libtpu: 0.0.40
codegen_flags: <defaults>
</compile_context>

<pallas_src>
import jax
import jax.numpy as jnp
from jax import lax
from jax.experimental import pallas as pl
from jax.experimental.pallas import tpu as pltpu


CLUSTER_NUM = 3


def _task_cluster_kernel(q_ref, c_ref, score_ref):
    q = q_ref[...]                               # (TB, F), input dtype
    c = c_ref[...]                               # (K,  F), VMEM-resident

    # s[k, b] = sum_f c[k, f] * q[b, f]  ->  (K, TB); contract the lane axis
    # of both operands on the MXU, accumulate in f32.
    s = lax.dot_general(
        c, q,
        dimension_numbers=(((1,), (1,)), ((), ())),
        preferred_element_type=jnp.float32,
    )

    # Per-column softmax over the K = 3 cluster rows (sublane axis).
    s_max = jnp.max(s, axis=0, keepdims=True)
    e = jnp.exp(s - s_max)
    denom = jnp.sum(e, axis=0, keepdims=True)
    p = e * pl.reciprocal(denom, approx=False)   # exact reciprocal

    score_ref[...] = p.astype(score_ref.dtype)   # lane-dense (K, TB) store


def task_cluster_forward(query, cluster_centers, *, block_b=8192):
    """query: (B, F); cluster_centers: (K, F). Returns (score (B, K), X_CE (B, F))."""
    B, F = query.shape
    K, Fc = cluster_centers.shape
    assert F == Fc

    # Batch tile.  If B <= block_b the tile equals the full batch (satisfies
    # the (8,128) rule via "equals full array dim"); otherwise block_b is a
    # multiple of 128 so both the (TB, F) query block and the (K, TB) score
    # block are tiling-legal, and partial last tiles are handled by Pallas.
    TB = min(block_b, B)
    # Megacore (v7x): give the "parallel" batch axis >= 2 grid steps when the
    # batch is big enough to split into lane-aligned tiles.
    if pl.cdiv(B, TB) < 2 and B >= 2048:
        TB = ((B + 1) // 2 + 127) // 128 * 128

    grid = (pl.cdiv(B, TB),)

    score_kb = pl.pallas_call(
        _task_cluster_kernel,
        out_shape=jax.ShapeDtypeStruct((K, B), query.dtype),
        grid_spec=pltpu.PrefetchScalarGridSpec(
            num_scalar_prefetch=0,
            grid=grid,
            in_specs=[
                pl.BlockSpec((TB, F), lambda i: (i, 0)),  # query streams over B
                pl.BlockSpec((K, F), lambda i: (0, 0)),   # centers stay resident
            ],
            out_specs=pl.BlockSpec((K, TB), lambda i: (0, i)),  # lane-dense score
        ),
        compiler_params=pltpu.CompilerParams(
            # Batch tiles are independent -> shard across TCs (v7x megacore).
            dimension_semantics=("parallel",),
        ),
    )(query, cluster_centers)

    score = score_kb.T          # (B, K) layout expected by callers; tiny XLA op
    # X_CE = einsum('bk,bf->bf', score, query) == query (softmax rows sum to 1),
    # so it never touches HBM: no redundant writeback of B*F bytes.
    x_ce = query
    return score, x_ce


def _reference(query, centers):
    s = query @ centers.T
    s = jax.nn.softmax(s, axis=-1)
    xce = jnp.einsum('bk,bf->bf', s, query)
    return s, xce


def _check(B, F, block_b, key):
    k_q, k_c = jax.random.split(key)
    query = jax.random.normal(k_q, (B, F), dtype=jnp.float32)
    centers = jax.random.normal(k_c, (CLUSTER_NUM, F), dtype=jnp.float32)

    score, x_ce = task_cluster_forward(query, centers, block_b=block_b)
    jax.block_until_ready((score, x_ce))

    ref_score, ref_xce = _reference(query, centers)
    assert score.shape == ref_score.shape and x_ce.shape == ref_xce.shape
    assert jnp.allclose(score, ref_score, atol=1e-5, rtol=1e-5)
    assert jnp.allclose(x_ce, ref_xce, atol=1e-5, rtol=1e-5)


if __name__ == "__main__":
    key = jax.random.PRNGKey(0)
    k0, k1, k2 = jax.random.split(key, 3)

    hidden_dim = 32                  # FLAGS.hidden_dim
    F = hidden_dim + 96              # = 128 feature dim (lane-aligned)

    # Small single-tile case (B = 8, one grid step).
    _check(B=8, F=F, block_b=8192, key=k0)

    # Multi-tile case exercising the batch grid (2 full tiles).
    _check(B=256, F=F, block_b=128, key=k1)

    # Multi-tile case with a partial last tile (200 = 128 + 72).
    _check(B=200, F=F, block_b=128, key=k2)

    print("KERNEL_OK")
</pallas_src>

<mosaic_0001>
module attributes {stable_mosaic.version = 11 : i64} {
  func.func @_task_cluster_kernel(%arg0: i32, %arg1: memref<8x128xf32, #tpu.memory_space<vmem>>, %arg2: memref<3x128xf32, #tpu.memory_space<vmem>>, %arg3: memref<3x8xf32, #tpu.memory_space<vmem>>) attributes {dimension_semantics = [#tpu.dimension_semantics<parallel>], iteration_bounds = array<i64: 1>, scalar_prefetch = 0 : i64, scratch_operands = 0 : i64, tpu.core_type = #tpu.core_type<tc>, window_params = [{transform_indices = @transform_0, window_bounds = array<i64: 8, 128>}, {pipeline_mode = #tpu.pipeline_mode<synchronous>, transform_indices = @transform_1, window_bounds = array<i64: 3, 128>}, {transform_indices = @transform_2, window_bounds = array<i64: 3, 8>}]} {
    %c0 = arith.constant 0 : index
    %c0_0 = arith.constant 0 : index
    %0 = vector.load %arg1[%c0, %c0_0] : memref<8x128xf32, #tpu.memory_space<vmem>>, vector<8x128xf32>
    %c0_1 = arith.constant 0 : index
    %c0_2 = arith.constant 0 : index
    %1 = vector.load %arg2[%c0_1, %c0_2] : memref<3x128xf32, #tpu.memory_space<vmem>>, vector<3x128xf32>
    %cst = arith.constant dense<0.000000e+00> : vector<3x8xf32>
    %2 = tpu.matmul %1, %0, %cst {dimension_numbers = #tpu.dot_dimension_numbers<[1], [1], [0], [0], [0, 0, 1, 0], [], []>} : vector<3x128xf32>, vector<8x128xf32>, vector<3x8xf32> -> vector<3x8xf32>
    %cst_3 = arith.constant dense<0xFF800000> : vector<8xf32>
    %3 = vector.multi_reduction <maximumf>, %2, %cst_3 [0] : vector<3x8xf32> to vector<8xf32>
    %4 = vector.shape_cast %3 : vector<8xf32> to vector<1x8xf32>
    %5 = vector.broadcast %4 : vector<1x8xf32> to vector<3x8xf32>
    %6 = arith.subf %2, %5 : vector<3x8xf32>
    %7 = math.exp %6 : vector<3x8xf32>
    %cst_4 = arith.constant dense<0.000000e+00> : vector<8xf32>
    %8 = vector.multi_reduction <add>, %7, %cst_4 [0] : vector<3x8xf32> to vector<8xf32>
    %9 = vector.shape_cast %8 : vector<8xf32> to vector<1x8xf32>
    %10 = tpu.reciprocal %9 : vector<1x8xf32> -> vector<1x8xf32>
    %11 = vector.broadcast %10 : vector<1x8xf32> to vector<3x8xf32>
    %12 = arith.mulf %7, %11 : vector<3x8xf32>
    %c0_5 = arith.constant 0 : index
    %c0_6 = arith.constant 0 : index
    %13 = vector.load %arg3[%c0_5, %c0_6] : memref<3x8xf32, #tpu.memory_space<vmem>>, vector<3x8xf32>
    tpu.vector_store %arg3[%c0_5, %c0_6], %12 {strides = array<i32>} : memref<3x8xf32, #tpu.memory_space<vmem>>, vector<3x8xf32>,
    return
  }
  func.func @transform_0(%arg0: i32) -> (i32, i32) {
    %c0_i32 = arith.constant 0 : i32
    %c0_i32_0 = arith.constant 0 : i32
    return %arg0, %c0_i32 : i32, i32
  }
  func.func @transform_1(%arg0: i32) -> (i32, i32) {
    %c0_i32 = arith.constant 0 : i32
    %c0_i32_0 = arith.constant 0 : i32
    %c0_i32_1 = arith.constant 0 : i32
    return %c0_i32, %c0_i32_0 : i32, i32
  }
  func.func @transform_2(%arg0: i32) -> (i32, i32) {
    %c0_i32 = arith.constant 0 : i32
    %c0_i32_0 = arith.constant 0 : i32
    return %c0_i32, %arg0 : i32, i32
  }
}

</mosaic_0001>

<llo_original>
// kernel: tpu_custom_call.1
$region0: #{tpu_custom_call.1}
  #allocation0 [shape = 'u32[]', space=smem, size = 0x4, offset = 0x4, fixed_abs, tag = 'smem constant byte address 0x4 - core index']
  #allocation1 [shape = 'u32[72,128]{1,0:T(1,128)}', space=vmem, size = 0x9000, scoped, tag = 'internal scratch']
  %s0 = inlined_call_operand.hbm [shape: f32[8,128], index: 0, kind: input, shape index: {}]
  %s1 = inlined_call_operand.hbm [shape: f32[3,128], index: 1, kind: input, shape index: {}]
  %s2 = inlined_call_operand.hbm [shape: f32[3,8], index: 2, kind: output, shape index: {}]
  %s3 = sld [smem:[#allocation0]]
  $region26: #{tpu_custom_call.1} parent=0
    _
  %s5 = ssub.s32 1, %s3
  %s6 = scalar_select 0, %s5, %s3
  $region1: #{tpu_custom_call.1} parent=0
    #allocation2 [shape = 'u8[4096]{0}', space=vmem, size = 0x1000, scoped, tag = 'input window, operand 0, single buffered']
    #allocation3 [shape = 's32[1]{0}', space=sflag, size = 0x4, scoped, tag = 'scoped memory for tpu_custom_call.1']
    #allocation4 [shape = 's32[1]{0}', space=sflag, size = 0x4, scoped, tag = 'scoped memory for tpu_custom_call.1']
    #allocation5 [shape = 'u8[2048]{0}', space=vmem, size = 0x800, scoped, tag = 'input window, operand 1, single buffered']
    #allocation6 [shape = 's32[1]{0}', space=sflag, size = 0x4, scoped, tag = 'scoped memory for tpu_custom_call.1']
    #allocation7 [shape = 'u8[2048]{0}', space=vmem, size = 0x800, scoped, tag = 'output window, operand 0, single buffered']
    %7 = vsyncpa [#allocation3], 0
    %8 = vsyncpa [#allocation6], 0
    %9 = vsyncpa [#allocation4], 0
    // Predicated region
    $region2: #{tpu_custom_call.1} parent=1 // pred_check
      _
    $region3: #{tpu_custom_call.1} parent=1 // pred_check_branch
      %11 = sbr.rel (0) target = $region5
    $region4: #{tpu_custom_call.1} parent=1 // pred_region
      %13 = vsyncadd [#allocation3], 0
      %s15 = sshll.u32 %s0, 4
      %s16 = int_to_ptr.hbm [resolvable:$true] %s15
      %s17 = sshll.u32 [#allocation2], 4
      %s18 = int_to_ptr.vmem [resolvable:$true] %s17
      %20 = dma.hbm_to_vmem [thread:$0]  %s16, 128, %s18, [#allocation3]
    $region5: #{tpu_custom_call.1} parent=1 // pred_fallthru
      _
    // Predicated region
    $region6: #{tpu_custom_call.1} parent=1 // pred_check
      _
    $region7: #{tpu_custom_call.1} parent=1 // pred_check_branch
      %22 = sbr.rel (0) target = $region9
    $region8: #{tpu_custom_call.1} parent=1 // pred_region
      %24 = vsyncadd [#allocation6], 0
      %s26 = sshll.u32 %s1, 4
      %s27 = int_to_ptr.hbm [resolvable:$true] %s26
      %s28 = sshll.u32 [#allocation5], 4
      %s29 = int_to_ptr.vmem [resolvable:$true] %s28
      %31 = dma.hbm_to_vmem [thread:$0]  %s27, 64, %s29, [#allocation6]
    $region9: #{tpu_custom_call.1} parent=1 // pred_fallthru
      _
    // Predicated region
    $region10: #{tpu_custom_call.1} parent=1 // pred_check
      _
    $region11: #{tpu_custom_call.1} parent=1 // pred_check_branch
      %33 = sbr.rel (0) target = $region13
    $region12: #{tpu_custom_call.1} parent=1 // pred_region
      %35 = dma.done [#allocation3], 128
    $region13: #{tpu_custom_call.1} parent=1 // pred_fallthru
      _
    // Predicated region
    $region14: #{tpu_custom_call.1} parent=1 // pred_check
      _
    $region15: #{tpu_custom_call.1} parent=1 // pred_check_branch
      %37 = sbr.rel (0) target = $region17
    $region16: #{tpu_custom_call.1} parent=1 // pred_region
      %39 = dma.done [#allocation6], 64
    $region17: #{tpu_custom_call.1} parent=1 // pred_fallthru
      _
    %v40 = vld [vmem:[#allocation2] sm:$0xff]
    %v41 = vld [vmem:[#allocation5] sm:$0x7]
    %42 = vmatpush.xpose.msra.mxu0 0.0
    %43 = vmatpush.xpose.msra.mxu0 0.0
    %44 = vmatpush.xpose.msra.mxu0 0.0
    %45 = vmatpush.xpose.msra.mxu0 0.0
    %46 = vmatpush.xpose.msra.mxu0 0.0
    %47 = vmatpush.xpose.msra.mxu0 0.0
    %48 = vmatpush.xpose.msra.mxu0 0.0
    %49 = vmatpush.xpose.msra.mxu0 0.0
    %50 = vmatpush.xpose.msra.mxu0 0.0
    %51 = vmatpush.xpose.msra.mxu0 0.0
    %52 = vmatpush.xpose.msra.mxu0 0.0
    %53 = vmatpush.xpose.msra.mxu0 0.0
    %54 = vmatpush.xpose.msra.mxu0 0.0
    %55 = vmatpush.xpose.msra.mxu0 0.0
    %56 = vmatpush.xpose.msra.mxu0 0.0
    %57 = vmatpush.xpose.msra.mxu0 %v40
    %58 = vmatmul.f32.gmra.mxu0 %v41
    %v59 = vpop.f32.mrf.mxu0
    %v60 = vadd.f32 0.0, %v59
    %61 = vdwg.mxu0
    %vm62 = vcmask 59392
    %v63 = vsel %vm62, %v60, -inf
    %v64 = vrot.slane %v63, 4
    %v65 = vmax.f32 %v63, %v64
    %v66 = vrot.slane %v65, 2
    %v67 = vmax.f32 %v65, %v66
    %v68 = vrot.slane %v67, 1
    %v69 = vmax.f32 %v67, %v68
    %v70 = vsub.f32 %v60, %v69
    %v71 = vmul.f32 %v70, 1.442695
    %v72 = vpow.pop %v71
    %v73 = vsel %vm62, %v72, 0.0
    %v74 = vrot.slane %v73, 4
    %v75 = vadd.f32 %v73, %v74
    %v76 = vrot.slane %v75, 2
    %v77 = vadd.f32 %v75, %v76
    %v78 = vrot.slane %v77, 1
    %v79 = vadd.f32 %v77, %v78
    %v80 = vrcp.pop %v79
    %v81 = vmul.f32 %v79, %v80
    %v82 = vsub.f32 1.0, %v81
    %v83 = vmul.f32 %v80, %v82
    %v84 = vadd.f32 %v80, %v83
    %vm85 = vweird.f32 %v79
    %vm86 = vweird.f32 %v80
    %vm87 = vmor %vm85, %vm86
    %v88 = vsel %vm87, %v80, %v84
    %v89 = vand.u32 2147483647, %v79
    %vm90 = vcmp.eq.f32.partialorder %v89, 8.507059e+37
    %v91 = vand.u32 %v79, 2147483648
    %v92 = vor.u32 1.1754944e-38, %v91
    %v93 = vsel %vm90, %v92, %v88
    %v94 = vmul.f32 %v72, %v93
    %95 = vst.msk [vmem:[#allocation7] sm:$0x7] %vm62, %v94
    // Predicated region
    $region18: #{tpu_custom_call.1} parent=1 // pred_check
      _
    $region19: #{tpu_custom_call.1} parent=1 // pred_check_branch
      %97 = sbr.rel (0) target = $region21
    $region20: #{tpu_custom_call.1} parent=1 // pred_region
      %99 = vsyncadd [#allocation4], 0
      %s101 = sshll.u32 [#allocation7], 4
      %s102 = int_to_ptr.vmem [resolvable:$true] %s101
      %s103 = sshll.u32 %s2, 4
      %s104 = int_to_ptr.hbm [resolvable:$true] %s103
      %106 = dma.vmem_to_hbm [thread:$0]  %s102, 64, %s104, [#allocation4]
    $region21: #{tpu_custom_call.1} parent=1 // pred_fallthru
      _
    // Predicated region
    $region22: #{tpu_custom_call.1} parent=1 // pred_check
      _
    $region23: #{tpu_custom_call.1} parent=1 // pred_check_branch
      %108 = sbr.rel (0) target = $region25
    $region24: #{tpu_custom_call.1} parent=1 // pred_region
      %110 = dma.done [#allocation4], 64
    $region25: #{tpu_custom_call.1} parent=1 // pred_fallthru
      _
    %111 = vsyncpa [#allocation3], 1
    %112 = vsyncpa [#allocation6], 1
    %113 = vsyncpa [#allocation4], 1

</llo_original>
